<compile_context>
chip_gen: v6e
topology: v6e:2x2x1
jax: 0.10.0
libtpu: 0.0.40
codegen_flags: <defaults>
</compile_context>

<pallas_src>
import functools

import jax
import jax.numpy as jnp
from jax.experimental import pallas as pl
from jax.experimental.pallas import tpu as pltpu


def flux_redux_kernel(x_ref, w_up_ref, b_up_ref, w_dn_ref, b_dn_ref,
                      o_ref, acc_ref, *, approx_sigmoid: bool):
    """One (row-tile, hidden-tile) step of Linear -> SiLU -> Linear."""
    k = pl.program_id(1)

    @pl.when(k == 0)
    def _init():
        acc_ref[...] = jnp.zeros_like(acc_ref)

    # Up-projection for this hidden slice: (tm, K) @ (K, tk) -> (tm, tk).
    h = jnp.dot(x_ref[...], w_up_ref[...], preferred_element_type=jnp.float32)
    h = h + b_up_ref[...].astype(jnp.float32)

    # SiLU in f32.  exp() sits on the EUP slot; with approx_sigmoid the
    # reciprocal also goes to the EUP (free filler under MXU-bound steady
    # state), otherwise an exact divide is used.
    if approx_sigmoid:
        sig = pl.reciprocal(1.0 + jnp.exp(-h), approx=True)
    else:
        sig = 1.0 / (1.0 + jnp.exp(-h))
    h = h * sig

    # Partial down-projection for this hidden slice, accumulated in f32.
    # Cast h to the weight dtype so bf16 weights take the bf16 MXU path.
    acc_ref[...] += jnp.dot(h.astype(w_dn_ref.dtype), w_dn_ref[...],
                            preferred_element_type=jnp.float32)

    @pl.when(k == pl.num_programs(1) - 1)
    def _finalize():
        o_ref[...] = (acc_ref[...] + b_dn_ref[...].astype(jnp.float32)
                      ).astype(o_ref.dtype)


def _round_up(n, m):
    return ((n + m - 1) // m) * m


def _num_tensorcores():
    """Heuristic TensorCore count per chip (drives the row-tile split)."""
    try:
        kind = jax.devices()[0].device_kind.lower()
    except Exception:
        return 1
    # v7x exposes 2 TCs; v4/v5p are megacore (2 TCs behind one device).
    if "v7" in kind or "v4" in kind or "v5p" in kind:
        return 2
    return 1


def _tk_candidates(hidden, cap=2048):
    """Hidden-axis tile candidates: divisors of `hidden`, multiples of 128,
    largest first, capped so a single slice never gets absurdly big."""
    if hidden <= 128:
        return [hidden]
    top = min(cap, (hidden // 128) * 128)
    cands = [t for t in range(top, 0, -128) if hidden % t == 0]
    return cands or [hidden]


def _vmem_bytes(tm, tk, redux_dim, txt_in, x_it, w_it, out_it):
    """Estimated VMEM footprint with default double-buffering everywhere."""
    return (2 * tm * redux_dim * x_it          # x row tile
            + 2 * redux_dim * tk * w_it        # W_up slice
            + 2 * tk * w_it                    # b_up slice
            + 2 * tk * txt_in * w_it           # W_dn slice (dominant)
            + 2 * txt_in * w_it                # b_dn
            + 2 * tm * txt_in * out_it         # output row tile
            + tm * txt_in * 4)                 # f32 accumulator scratch


def _select_tiles(M, redux_dim, hidden, txt_in, x_it, w_it, out_it,
                  budget, n_cores):
    """Pick (tm, tk): as few row tiles as possible (1 per TensorCore) so the
    weights are streamed from HBM only once per core, with tk clamped so the
    double-buffered footprint fits the per-generation VMEM budget."""
    cands = _tk_candidates(hidden)
    n_tiles = max(1, n_cores)
    max_tiles = max(n_tiles, (M + 7) // 8)
    best = None
    while n_tiles <= max_tiles:
        chunk = -(-M // n_tiles)                    # ceil(M / n_tiles)
        align = 128 if chunk >= 128 else 8
        tm = _round_up(chunk, align)
        for tk in cands:
            if _vmem_bytes(tm, tk, redux_dim, txt_in, x_it, w_it, out_it) <= budget:
                return tm, tk
        best = (tm, cands[-1])
        n_tiles += 1
    return best  # smallest configuration found; let the compiler try it


def flux_redux_forward(x, w_up, b_up, w_dn, b_dn, *, tm=None, tk=None,
                       vmem_limit_bytes=None, approx_sigmoid=False):
    """x: (batch, seq, redux_dim) -> (batch, seq, txt_in_features).

    w_up: (redux_dim, hidden)   b_up: (hidden,)      hidden = txt_in * 3
    w_dn: (hidden, txt_in)      b_dn: (txt_in,)
    tm/tk=None -> auto tile selection (recommended).
    """
    batch, seq, redux_dim = x.shape
    hidden = w_up.shape[1]
    txt_in = w_dn.shape[1]

    M = batch * seq
    x2d = x.reshape(M, redux_dim)
    b_up2d = b_up.reshape(1, hidden)
    b_dn2d = b_dn.reshape(1, txt_in)

    if vmem_limit_bytes is None:
        # Scoped VMEM limit from the hardware-reported capacity
        # (~128 MiB on v5e/v6e, 64 MiB on v7x); conservative fallback.
        try:
            vmem_limit_bytes = int(
                pltpu.get_tpu_info().vmem_capacity_bytes * 0.85)
        except Exception:
            vmem_limit_bytes = 64 * 1024 * 1024
    budget = int(vmem_limit_bytes * 0.9)

    x_it = jnp.dtype(x.dtype).itemsize
    w_it = jnp.dtype(w_dn.dtype).itemsize
    out_it = x_it

    auto_tm, auto_tk = _select_tiles(M, redux_dim, hidden, txt_in,
                                     x_it, w_it, out_it, budget,
                                     _num_tensorcores())

    if tm is None:
        tm_eff = auto_tm
    else:
        tm_eff = max(8, (min(tm, _round_up(M, 8)) // 8) * 8)

    if tk is None:
        tk_eff = auto_tk
    elif tk <= hidden and hidden % tk == 0 and (tk % 128 == 0 or tk == hidden):
        tk_eff = tk
    else:
        tk_eff = auto_tk

    M_pad = _round_up(M, tm_eff)
    if M_pad != M:
        x2d = jnp.pad(x2d, ((0, M_pad - M), (0, 0)))

    grid = (M_pad // tm_eff, hidden // tk_eff)

    kernel = functools.partial(flux_redux_kernel, approx_sigmoid=approx_sigmoid)

    out2d = pl.pallas_call(
        kernel,
        out_shape=jax.ShapeDtypeStruct((M_pad, txt_in), x.dtype),
        grid_spec=pltpu.PrefetchScalarGridSpec(
            num_scalar_prefetch=0,
            grid=grid,
            in_specs=[
                pl.BlockSpec((tm_eff, redux_dim), lambda i, k: (i, 0)),  # x rows
                pl.BlockSpec((redux_dim, tk_eff), lambda i, k: (0, k)),  # W_up cols
                pl.BlockSpec((1, tk_eff),         lambda i, k: (0, k)),  # b_up slice
                pl.BlockSpec((tk_eff, txt_in),    lambda i, k: (k, 0)),  # W_dn rows
                pl.BlockSpec((1, txt_in),         lambda i, k: (0, 0)),  # b_dn
            ],
            out_specs=pl.BlockSpec((tm_eff, txt_in), lambda i, k: (i, 0)),
            scratch_shapes=[pltpu.VMEM((tm_eff, txt_in), jnp.float32)],
        ),
        compiler_params=pltpu.CompilerParams(
            dimension_semantics=("parallel", "arbitrary"),
            vmem_limit_bytes=vmem_limit_bytes,
        ),
    )(x2d, w_up, b_up2d, w_dn, b_dn2d)

    return out2d[:M].reshape(batch, seq, txt_in)


def init_params(key, redux_dim, txt_in_features, dtype=jnp.float32):
    """Synthetic init matching PyTorch Linear shapes (weights pre-transposed
    to (in, out)); uniform(-1/sqrt(fan_in), 1/sqrt(fan_in)) like nn.Linear."""
    hidden = txt_in_features * 3
    k1, k2, k3, k4 = jax.random.split(key, 4)
    bound_up = 1.0 / (redux_dim ** 0.5)
    bound_dn = 1.0 / (hidden ** 0.5)
    w_up = jax.random.uniform(k1, (redux_dim, hidden), dtype,
                              minval=-bound_up, maxval=bound_up)
    b_up = jax.random.uniform(k2, (hidden,), dtype,
                              minval=-bound_up, maxval=bound_up)
    w_dn = jax.random.uniform(k3, (hidden, txt_in_features), dtype,
                              minval=-bound_dn, maxval=bound_dn)
    b_dn = jax.random.uniform(k4, (txt_in_features,), dtype,
                              minval=-bound_dn, maxval=bound_dn)
    return w_up, b_up, w_dn, b_dn


def reference_forward(x, w_up, b_up, w_dn, b_dn):
    h = jnp.einsum("bsk,kh->bsh", x, w_up) + b_up
    h = h * jax.nn.sigmoid(h)
    return jnp.einsum("bsh,hn->bsn", h, w_dn) + b_dn


if __name__ == "__main__":
    # Small shapes consistent with the module (full size: redux_dim=1152,
    # txt_in=4096, hidden=12288).  seq=9 gives M=18, exercising row padding.
    batch, seq = 2, 9
    redux_dim = 128
    txt_in_features = 128            # hidden = 3 * 128 = 384

    key = jax.random.PRNGKey(0)
    kx, kp = jax.random.split(key)
    x = jax.random.normal(kx, (batch, seq, redux_dim), dtype=jnp.float32)
    w_up, b_up, w_dn, b_dn = init_params(kp, redux_dim, txt_in_features)

    ref = reference_forward(x, w_up, b_up, w_dn, b_dn)

    # Auto-tiled f32 path (1-2 row tiles, weights streamed once): exact check.
    out = jax.block_until_ready(flux_redux_forward(x, w_up, b_up, w_dn, b_dn))
    assert out.shape == (batch, seq, txt_in_features)
    assert jnp.allclose(out, ref, atol=1e-4, rtol=1e-4)

    # Forced small tiles: exercises multi-step hidden reduction, multiple row
    # tiles, and padded-row slicing.
    out2 = jax.block_until_ready(
        flux_redux_forward(x, w_up, b_up, w_dn, b_dn, tm=16, tk=128))
    assert jnp.allclose(out2, ref, atol=1e-4, rtol=1e-4)

    # bf16 weights/activations (production MXU fast path, f32 accumulation,
    # EUP-approx sigmoid reciprocal).
    x16 = x.astype(jnp.bfloat16)
    p16 = [p.astype(jnp.bfloat16) for p in (w_up, b_up, w_dn, b_dn)]
    out16 = jax.block_until_ready(
        flux_redux_forward(x16, *p16, approx_sigmoid=True)).astype(jnp.float32)
    assert jnp.allclose(out16, ref, atol=5e-2, rtol=5e-2)

    print("KERNEL_OK")
</pallas_src>

<mosaic_0001>
module attributes {stable_mosaic.version = 11 : i64} {
  func.func @flux_redux_kernel(%arg0: i32, %arg1: i32, %arg2: memref<24x128xf32, #tpu.memory_space<vmem>>, %arg3: memref<128x384xf32, #tpu.memory_space<vmem>>, %arg4: memref<1x384xf32, #tpu.memory_space<vmem>>, %arg5: memref<384x128xf32, #tpu.memory_space<vmem>>, %arg6: memref<1x128xf32, #tpu.memory_space<vmem>>, %arg7: memref<24x128xf32, #tpu.memory_space<vmem>>, %arg8: memref<24x128xf32, #tpu.memory_space<vmem>>) attributes {dimension_semantics = [#tpu.dimension_semantics<parallel>, #tpu.dimension_semantics<arbitrary>], iteration_bounds = array<i64: 1, 1>, scalar_prefetch = 0 : i64, scratch_operands = 1 : i64, tpu.core_type = #tpu.core_type<tc>, window_params = [{transform_indices = @transform_0, window_bounds = array<i64: 24, 128>}, {transform_indices = @transform_1, window_bounds = array<i64: 128, 384>}, {transform_indices = @transform_2, window_bounds = array<i64: 1, 384>}, {transform_indices = @transform_3, window_bounds = array<i64: 384, 128>}, {pipeline_mode = #tpu.pipeline_mode<synchronous>, transform_indices = @transform_4, window_bounds = array<i64: 1, 128>}, {transform_indices = @transform_5, window_bounds = array<i64: 24, 128>}]} {
    %c0_i32 = arith.constant 0 : i32
    %0 = arith.cmpi eq, %arg1, %c0_i32 : i32
    %1 = arith.extui %0 : i1 to i32
    %c0_i32_0 = arith.constant 0 : i32
    %2 = arith.cmpi ne, %1, %c0_i32_0 : i32
    scf.if %2 {
      %cst_18 = arith.constant 0.000000e+00 : f32
      %25 = vector.broadcast %cst_18 : f32 to vector<24x128xf32>
      %c0_19 = arith.constant 0 : index
      %c0_20 = arith.constant 0 : index
      %26 = vector.load %arg8[%c0_19, %c0_20] : memref<24x128xf32, #tpu.memory_space<vmem>>, vector<24x128xf32>
      tpu.vector_store %arg8[%c0_19, %c0_20], %25 {strides = array<i32>} : memref<24x128xf32, #tpu.memory_space<vmem>>, vector<24x128xf32>,
    } else {
    }
    %c0 = arith.constant 0 : index
    %c0_1 = arith.constant 0 : index
    %3 = vector.load %arg2[%c0, %c0_1] : memref<24x128xf32, #tpu.memory_space<vmem>>, vector<24x128xf32>
    %c0_2 = arith.constant 0 : index
    %c0_3 = arith.constant 0 : index
    %4 = vector.load %arg3[%c0_2, %c0_3] : memref<128x384xf32, #tpu.memory_space<vmem>>, vector<128x384xf32>
    %cst = arith.constant dense<0.000000e+00> : vector<24x384xf32>
    %5 = tpu.matmul %3, %4, %cst {dimension_numbers = #tpu.dot_dimension_numbers<[1], [0], [0], [1], [0, 0, 1, 1], [], []>} : vector<24x128xf32>, vector<128x384xf32>, vector<24x384xf32> -> vector<24x384xf32>
    %c0_4 = arith.constant 0 : index
    %c0_5 = arith.constant 0 : index
    %6 = vector.load %arg4[%c0_4, %c0_5] : memref<1x384xf32, #tpu.memory_space<vmem>>, vector<1x384xf32>
    %7 = vector.broadcast %6 : vector<1x384xf32> to vector<24x384xf32>
    %8 = arith.addf %5, %7 : vector<24x384xf32>
    %cst_6 = arith.constant 0.000000e+00 : f32
    %9 = vector.broadcast %cst_6 : f32 to vector<24x384xf32>
    %10 = arith.subf %9, %8 : vector<24x384xf32>
    %11 = math.exp %10 : vector<24x384xf32>
    %cst_7 = arith.constant 1.000000e+00 : f32
    %12 = vector.broadcast %cst_7 : f32 to vector<24x384xf32>
    %13 = arith.addf %12, %11 : vector<24x384xf32>
    %cst_8 = arith.constant 1.000000e+00 : f32
    %14 = vector.broadcast %cst_8 : f32 to vector<24x384xf32>
    %15 = arith.divf %14, %13 : vector<24x384xf32>
    %16 = arith.mulf %8, %15 : vector<24x384xf32>
    %c0_9 = arith.constant 0 : index
    %c0_10 = arith.constant 0 : index
    %17 = vector.load %arg8[%c0_9, %c0_10] : memref<24x128xf32, #tpu.memory_space<vmem>>, vector<24x128xf32>
    %c0_11 = arith.constant 0 : index
    %c0_12 = arith.constant 0 : index
    %18 = vector.load %arg5[%c0_11, %c0_12] : memref<384x128xf32, #tpu.memory_space<vmem>>, vector<384x128xf32>
    %cst_13 = arith.constant dense<0.000000e+00> : vector<24x128xf32>
    %19 = tpu.matmul %16, %18, %cst_13 {dimension_numbers = #tpu.dot_dimension_numbers<[1], [0], [0], [1], [0, 0, 1, 1], [], []>} : vector<24x384xf32>, vector<384x128xf32>, vector<24x128xf32> -> vector<24x128xf32>
    %20 = arith.addf %17, %19 : vector<24x128xf32>
    %c0_14 = arith.constant 0 : index
    %c0_15 = arith.constant 0 : index
    %21 = vector.load %arg8[%c0_14, %c0_15] : memref<24x128xf32, #tpu.memory_space<vmem>>, vector<24x128xf32>
    tpu.vector_store %arg8[%c0_14, %c0_15], %20 {strides = array<i32>} : memref<24x128xf32, #tpu.memory_space<vmem>>, vector<24x128xf32>,
    %c0_i32_16 = arith.constant 0 : i32
    %22 = arith.cmpi eq, %arg1, %c0_i32_16 : i32
    %23 = arith.extui %22 : i1 to i32
    %c0_i32_17 = arith.constant 0 : i32
    %24 = arith.cmpi ne, %23, %c0_i32_17 : i32
    scf.if %24 {
      %c0_18 = arith.constant 0 : index
      %c0_19 = arith.constant 0 : index
      %25 = vector.load %arg8[%c0_18, %c0_19] : memref<24x128xf32, #tpu.memory_space<vmem>>, vector<24x128xf32>
      %c0_20 = arith.constant 0 : index
      %c0_21 = arith.constant 0 : index
      %26 = vector.load %arg6[%c0_20, %c0_21] : memref<1x128xf32, #tpu.memory_space<vmem>>, vector<1x128xf32>
      %27 = vector.broadcast %26 : vector<1x128xf32> to vector<24x128xf32>
      %28 = arith.addf %25, %27 : vector<24x128xf32>
      %c0_22 = arith.constant 0 : index
      %c0_23 = arith.constant 0 : index
      %29 = vector.load %arg7[%c0_22, %c0_23] : memref<24x128xf32, #tpu.memory_space<vmem>>, vector<24x128xf32>
      tpu.vector_store %arg7[%c0_22, %c0_23], %28 {strides = array<i32>} : memref<24x128xf32, #tpu.memory_space<vmem>>, vector<24x128xf32>,
    } else {
    }
    return
  }
  func.func @transform_0(%arg0: i32, %arg1: i32) -> (i32, i32) {
    %c0_i32 = arith.constant 0 : i32
    %c0_i32_0 = arith.constant 0 : i32
    return %arg0, %c0_i32 : i32, i32
  }
  func.func @transform_1(%arg0: i32, %arg1: i32) -> (i32, i32) {
    %c0_i32 = arith.constant 0 : i32
    %c0_i32_0 = arith.constant 0 : i32
    return %c0_i32, %arg1 : i32, i32
  }
  func.func @transform_2(%arg0: i32, %arg1: i32) -> (i32, i32) {
    %c0_i32 = arith.constant 0 : i32
    %c0_i32_0 = arith.constant 0 : i32
    return %c0_i32, %arg1 : i32, i32
  }
  func.func @transform_3(%arg0: i32, %arg1: i32) -> (i32, i32) {
    %c0_i32 = arith.constant 0 : i32
    %c0_i32_0 = arith.constant 0 : i32
    return %arg1, %c0_i32 : i32, i32
  }
  func.func @transform_4(%arg0: i32, %arg1: i32) -> (i32, i32) {
    %c0_i32 = arith.constant 0 : i32
    %c0_i32_0 = arith.constant 0 : i32
    %c0_i32_1 = arith.constant 0 : i32
    return %c0_i32, %c0_i32_0 : i32, i32
  }
  func.func @transform_5(%arg0: i32, %arg1: i32) -> (i32, i32) {
    %c0_i32 = arith.constant 0 : i32
    %c0_i32_0 = arith.constant 0 : i32
    return %arg0, %c0_i32 : i32, i32
  }
}

</mosaic_0001>

<llo_original>
// kernel: tpu_custom_call.1
$region0: #{tpu_custom_call.1}
  #allocation0 [shape = 'u32[]', space=smem, size = 0x4, offset = 0x4, fixed_abs, tag = 'smem constant byte address 0x4 - core index']
  #allocation1 [shape = 'u32[144,128]{1,0:T(1,128)}', space=vmem, size = 0x12000, scoped, tag = 'internal scratch']
  #allocation2 [shape = 'f32[24,128]{1,0:T(8,128)}', space=vmem, size = 0x3000, scoped, tag = 'scratch operand']
  %s0 = inlined_call_operand.hbm [shape: f32[24,128], index: 0, kind: input, shape index: {}]
  %s1 = inlined_call_operand.hbm [shape: f32[128,384], index: 1, kind: input, shape index: {}]
  %s2 = inlined_call_operand.vmem [shape: f32[1,384], index: 2, kind: input, shape index: {}]
  %s3 = inlined_call_operand.hbm [shape: f32[384,128], index: 3, kind: input, shape index: {}]
  %s4 = inlined_call_operand.vmem [shape: f32[1,128], index: 4, kind: input, shape index: {}]
  %s5 = inlined_call_operand.hbm [shape: f32[24,128], index: 5, kind: output, shape index: {}]
  %s6 = sld [smem:[#allocation0]]
  $region50: #{tpu_custom_call.1} parent=0
    _
  %s8 = ssub.s32 1, %s6
  %s9 = scalar_select 0, %s8, %s6
  $region1: #{tpu_custom_call.1} parent=0
    #allocation3 [shape = 'u8[12288]{0}', space=vmem, size = 0x3000, scoped, tag = 'input window, operand 0, single buffered']
    #allocation4 [shape = 's32[1]{0}', space=sflag, size = 0x4, scoped, tag = 'scoped memory for tpu_custom_call.1']
    #allocation5 [shape = 's32[1]{0}', space=sflag, size = 0x4, scoped, tag = 'scoped memory for tpu_custom_call.1']
    #allocation6 [shape = 'u8[196608]{0}', space=vmem, size = 0x30000, scoped, tag = 'input window, operand 1, single buffered']
    #allocation7 [shape = 's32[1]{0}', space=sflag, size = 0x4, scoped, tag = 'scoped memory for tpu_custom_call.1']
    #allocation8 [shape = 'u8[196608]{0}', space=vmem, size = 0x30000, scoped, tag = 'input window, operand 3, single buffered']
    #allocation9 [shape = 'u8[12288]{0}', space=vmem, size = 0x3000, scoped, tag = 'output window, operand 0, single buffered']
    %10 = vsyncpa [#allocation4], 0
    %11 = vsyncpa [#allocation7], 0
    %12 = vsyncpa [#allocation5], 0
    // Predicated region
    $region2: #{tpu_custom_call.1} parent=1 // pred_check
      _
    $region3: #{tpu_custom_call.1} parent=1 // pred_check_branch
      %14 = sbr.rel (0) target = $region5
    $region4: #{tpu_custom_call.1} parent=1 // pred_region
      %s16 = ssub.s32 384, 384
      %17 = vsyncadd [#allocation4], %s16
      %s18 = sshll.u32 [#allocation3], 4
      %s19 = int_to_ptr.vmem [resolvable:$true] %s18
      %24 = dma.hbm_to_vmem [thread:$0]  %s0, 384, %s19, [#allocation4], 128, 128, 8
    $region5: #{tpu_custom_call.1} parent=1 // pred_fallthru
      _
    // Predicated region
    $region6: #{tpu_custom_call.1} parent=1 // pred_check
      _
    $region7: #{tpu_custom_call.1} parent=1 // pred_check_branch
      %26 = sbr.rel (0) target = $region9
    $region8: #{tpu_custom_call.1} parent=1 // pred_region
      %s28 = ssub.s32 6144, 6144
      %29 = vsyncadd [#allocation7], %s28
      %s30 = sshll.u32 [#allocation6], 4
      %s31 = int_to_ptr.vmem [resolvable:$true] %s30
      %36 = dma.hbm_to_vmem [thread:$0]  %s1, 6144, %s31, [#allocation7], 384, 384, 24
    $region9: #{tpu_custom_call.1} parent=1 // pred_fallthru
      _
    // Predicated region
    $region10: #{tpu_custom_call.1} parent=1 // pred_check
      _
    $region11: #{tpu_custom_call.1} parent=1 // pred_check_branch
      %38 = sbr.rel (0) target = $region13
    $region12: #{tpu_custom_call.1} parent=1 // pred_region
      _
    $region13: #{tpu_custom_call.1} parent=1 // pred_fallthru
      _
    // Predicated region
    $region14: #{tpu_custom_call.1} parent=1 // pred_check
      _
    $region15: #{tpu_custom_call.1} parent=1 // pred_check_branch
      %40 = sbr.rel (0) target = $region17
    $region16: #{tpu_custom_call.1} parent=1 // pred_region
      %s42 = ssub.s32 6144, 6144
      %43 = vsyncadd [#allocation7], %s42
      %s44 = sshll.u32 [#allocation8], 4
      %s45 = int_to_ptr.vmem [resolvable:$true] %s44
      %50 = dma.hbm_to_vmem [thread:$0]  %s3, 6144, %s45, [#allocation7], 128, 128, 8
    $region17: #{tpu_custom_call.1} parent=1 // pred_fallthru
      _
    // Predicated region
    $region18: #{tpu_custom_call.1} parent=1 // pred_check
      _
    $region19: #{tpu_custom_call.1} parent=1 // pred_check_branch
      %52 = sbr.rel (0) target = $region21
    $region20: #{tpu_custom_call.1} parent=1 // pred_region
      _
    $region21: #{tpu_custom_call.1} parent=1 // pred_fallthru
      _
    // Predicated region
    $region22: #{tpu_custom_call.1} parent=1 // pred_check
      _
    $region23: #{tpu_custom_call.1} parent=1 // pred_check_branch
      %54 = sbr.rel (0) target = $region25
    $region24: #{tpu_custom_call.1} parent=1 // pred_region
      %55 = dma.done [#allocation4], 384
    $region25: #{tpu_custom_call.1} parent=1 // pred_fallthru
      _
    // Predicated region
    $region26: #{tpu_custom_call.1} parent=1 // pred_check
      _
    $region27: #{tpu_custom_call.1} parent=1 // pred_check_branch
      %57 = sbr.rel (0) target = $region29
    $region28: #{tpu_custom_call.1} parent=1 // pred_region
      %58 = dma.done [#allocation7], 6144
    $region29: #{tpu_custom_call.1} parent=1 // pred_fallthru
      _
    // Predicated region
    $region30: #{tpu_custom_call.1} parent=1 // pred_check
      _
    $region31: #{tpu_custom_call.1} parent=1 // pred_check_branch
      %60 = sbr.rel (0) target = $region33
    $region32: #{tpu_custom_call.1} parent=1 // pred_region
      %61 = dma.done [#allocation7], 6144
    $region33: #{tpu_custom_call.1} parent=1 // pred_fallthru
      _
    %p62 = scmp.eq.s32.totalorder 0, 0
    // Predicated region
    $region34: #{tpu_custom_call.1} parent=1 // pred_check
      %p63 = pneg %p62
    $region35: #{tpu_custom_call.1} parent=1 // pred_check_branch
      %65 = sbr.rel (%p63) target = $region37
    $region36: #{tpu_custom_call.1} parent=1 // pred_region
      %66 = vst [vmem:[#allocation2] sm:$0xff] 0.0
      %67 = vst [vmem:[#allocation2 + $0x8] sm:$0xff] 0.0
      %68 = vst [vmem:[#allocation2 + $0x10] sm:$0xff] 0.0
    $region37: #{tpu_custom_call.1} parent=1 // pred_fallthru
      _
    %v69 = vld [vmem:[#allocation3] sm:$0xff]
    %v70 = vld [vmem:[#allocation3 + $0x8] sm:$0xff]
    %v71 = vld [vmem:[#allocation3 + $0x10] sm:$0xff]
    %v72 = vld [vmem:[#allocation6] sm:$0xff]
    %v73 = vld [vmem:[#allocation6 + $0x8] sm:$0xff]
    %v74 = vld [vmem:[#allocation6 + $0x10] sm:$0xff]
    %v75 = vld [vmem:[#allocation6 + $0x18] sm:$0xff]
    %v76 = vld [vmem:[#allocation6 + $0x20] sm:$0xff]
    %v77 = vld [vmem:[#allocation6 + $0x28] sm:$0xff]
    %v78 = vld [vmem:[#allocation6 + $0x30] sm:$0xff]
    %v79 = vld [vmem:[#allocation6 + $0x38] sm:$0xff]
    %v80 = vld [vmem:[#allocation6 + $0x40] sm:$0xff]
    %v81 = vld [vmem:[#allocation6 + $0x48] sm:$0xff]
    %v82 = vld [vmem:[#allocation6 + $0x50] sm:$0xff]
    %v83 = vld [vmem:[#allocation6 + $0x58] sm:$0xff]
    %v84 = vld [vmem:[#allocation6 + $0x60] sm:$0xff]
    %v85 = vld [vmem:[#allocation6 + $0x68] sm:$0xff]
    %v86 = vld [vmem:[#allocation6 + $0x70] sm:$0xff]
    %v87 = vld [vmem:[#allocation6 + $0x78] sm:$0xff]
    %v88 = vld [vmem:[#allocation6 + $0x80] sm:$0xff]
    %v89 = vld [vmem:[#allocation6 + $0x88] sm:$0xff]
    %v90 = vld [vmem:[#allocation6 + $0x90] sm:$0xff]
    %v91 = vld [vmem:[#allocation6 + $0x98] sm:$0xff]
    %v92 = vld [vmem:[#allocation6 + $0xa0] sm:$0xff]
    %v93 = vld [vmem:[#allocation6 + $0xa8] sm:$0xff]
    %v94 = vld [vmem:[#allocation6 + $0xb0] sm:$0xff]
    %v95 = vld [vmem:[#allocation6 + $0xb8] sm:$0xff]
    %v96 = vld [vmem:[#allocation6 + $0xc0] sm:$0xff]
    %v97 = vld [vmem:[#allocation6 + $0xc8] sm:$0xff]
    %v98 = vld [vmem:[#allocation6 + $0xd0] sm:$0xff]
    %v99 = vld [vmem:[#allocation6 + $0xd8] sm:$0xff]
    %v100 = vld [vmem:[#allocation6 + $0xe0] sm:$0xff]
    %v101 = vld [vmem:[#allocation6 + $0xe8] sm:$0xff]
    %v102 = vld [vmem:[#allocation6 + $0xf0] sm:$0xff]
    %v103 = vld [vmem:[#allocation6 + $0xf8] sm:$0xff]
    %v104 = vld [vmem:[#allocation6 + $0x100] sm:$0xff]
    %v105 = vld [vmem:[#allocation6 + $0x108] sm:$0xff]
    %v106 = vld [vmem:[#allocation6 + $0x110] sm:$0xff]
    %v107 = vld [vmem:[#allocation6 + $0x118] sm:$0xff]
    %v108 = vld [vmem:[#allocation6 + $0x120] sm:$0xff]
    %v109 = vld [vmem:[#allocation6 + $0x128] sm:$0xff]
    %v110 = vld [vmem:[#allocation6 + $0x130] sm:$0xff]
    %v111 = vld [vmem:[#allocation6 + $0x138] sm:$0xff]
    %v112 = vld [vmem:[#allocation6 + $0x140] sm:$0xff]
    %v113 = vld [vmem:[#allocation6 + $0x148] sm:$0xff]
    %v114 = vld [vmem:[#allocation6 + $0x150] sm:$0xff]
    %v115 = vld [vmem:[#allocation6 + $0x158] sm:$0xff]
    %v116 = vld [vmem:[#allocation6 + $0x160] sm:$0xff]
    %v117 = vld [vmem:[#allocation6 + $0x168] sm:$0xff]
    %v118 = vld [vmem:[#allocation6 + $0x170] sm:$0xff]
    %v119 = vld [vmem:[#allocation6 + $0x178] sm:$0xff]
    %v120 = vld [vmem:[%s2] sm:$0x7]
    %v122 = vlaneseq
    %v123 = vshrl.u32 %v122, 7
    %v124 = vsub.s32 0, %v123
    %v125 = vrot.slane %v120, %v124
    %v126 = vlaneseq
    %v127 = vshrl.u32 %v126, 7
    %v128 = vsub.s32 1, %v127
    %v129 = vrot.slane %v120, %v128
    %v130 = vlaneseq
    %v131 = vshrl.u32 %v130, 7
    %v132 = vsub.s32 2, %v131
    %v133 = vrot.slane %v120, %v132
    %137 = vmatprep.subr.mxu0 %v118
    %138 = vmatpush1.msra.mxu0 %v117
    %139 = vmatprep.subr.mxu0 %v115
    %140 = vmatpush1.msra.mxu0 %v114
    %141 = vmatprep.subr.mxu0 %v112
    %142 = vmatpush1.msra.mxu0 %v111
    %143 = vmatprep.subr.mxu0 %v109
    %144 = vmatpush1.msra.mxu0 %v108
    %145 = vmatprep.subr.mxu0 %v106
    %146 = vmatpush1.msra.mxu0 %v105
    %147 = vmatprep.subr.mxu0 %v103
    %148 = vmatpush1.msra.mxu0 %v102
    %149 = vmatprep.subr.mxu0 %v100
    %150 = vmatpush1.msra.mxu0 %v99
    %151 = vmatprep.subr.mxu0 %v97
    %152 = vmatpush1.msra.mxu0 %v96
    %153 = vmatprep.subr.mxu0 %v94
    %154 = vmatpush1.msra.mxu0 %v93
    %155 = vmatprep.subr.mxu0 %v91
    %156 = vmatpush1.msra.mxu0 %v90
    %157 = vmatprep.subr.mxu0 %v88
    %158 = vmatpush1.msra.mxu0 %v87
    %159 = vmatprep.subr.mxu0 %v85
    %160 = vmatpush1.msra.mxu0 %v84
    %161 = vmatprep.subr.mxu0 %v82
    %162 = vmatpush1.msra.mxu0 %v81
    %163 = vmatprep.subr.mxu0 %v79
    %164 = vmatpush1.msra.mxu0 %v78
    %165 = vmatprep.subr.mxu0 %v76
    %166 = vmatpush1.msra.mxu0 %v75
    %167 = vmatprep.subr.mxu0 %v73
    %168 = vmatpush1.msra.mxu0 %v72
    %169 = vmatprep.subr.mxu0 0.0
    %170 = vmatpush2.msra.mxu0 0.0
    %171 = vmatprep.subr.mxu0 0.0
    %172 = vmatpush2.msra.mxu0 0.0
    %173 = vmatprep.subr.mxu0 0.0
    %174 = vmatpush2.msra.mxu0 0.0
    %175 = vmatprep.subr.mxu0 0.0
    %176 = vmatpush2.msra.mxu0 0.0
    %177 = vmatprep.subr.mxu0 0.0
    %178 = vmatpush2.msra.mxu0 0.0
    %179 = vmatprep.subr.mxu0 0.0
    %180 = vmatpush2.msra.mxu0 0.0
    %181 = vmatprep.subr.mxu0 0.0
    %182 = vmatpush2.msra.mxu0 0.0
    %183 = vmatprep.subr.mxu0 0.0
    %184 = vmatpush2.msra.mxu0 0.0
    %185 = vmatprep.subr.mxu0 0.0
    %186 = vmatpush2.msra.mxu0 0.0
    %187 = vmatprep.subr.mxu0 0.0
    %188 = vmatpush2.msra.mxu0 0.0
    %189 = vmatprep.subr.mxu0 0.0
    %190 = vmatpush2.msra.mxu0 0.0
    %191 = vmatprep.subr.mxu0 0.0
    %192 = vmatpush2.msra.mxu0 0.0
    %193 = vmatprep.subr.mxu0 0.0
    %194 = vmatpush2.msra.mxu0 0.0
    %195 = vmatprep.subr.mxu0 0.0
    %196 = vmatpush2.msra.mxu0 0.0
    %197 = vmatprep.subr.mxu0 0.0
    %198 = vmatpush2.msra.mxu0 0.0
    %199 = vmatprep.subr.mxu0 0.0
    %200 = vmatpush2.msra.mxu0 0.0
    %201 = vmatprep.mubr.f32.mxu0 0.0
    %202 = vmatmul.mubr.f32.gmra.mxu0 %v69
    %v203 = vpop.f32.mrf.mxu0
    %v204 = vadd.f32 %v125, %v203
    %v205 = vpop.f32.mrf.mxu0
    %v206 = vadd.f32 %v129, %v205
    %207 = vmatprep.mubr.f32.mxu0 0.0
    %208 = vmatmul.mubr.f32.gmra.mxu0 %v70
    %v209 = vpop.f32.mrf.mxu0
    %v210 = vadd.f32 %v125, %v209
    %v211 = vpop.f32.mrf.mxu0
    %v212 = vadd.f32 %v129, %v211
    %213 = vmatprep.mubr.f32.mxu0 0.0
    %214 = vmatmul.mubr.f32.gmra.mxu0 %v71
    %v215 = vpop.f32.mrf.mxu0
    %v216 = vadd.f32 %v125, %v215
    %v217 = vpop.f32.mrf.mxu0
    %v218 = vadd.f32 %v129, %v217
    %219 = vdwg.mxu0
    %220 = vmatprep.subr.mxu0 0.0
    %221 = vmatpush1.msra.mxu0 %v119
    %222 = vmatprep.subr.mxu0 0.0
    %223 = vmatpush1.msra.mxu0 %v116
    %224 = vmatprep.subr.mxu0 0.0
    %225 = vmatpush1.msra.mxu0 %v113
    %226 = vmatprep.subr.mxu0 0.0
    %227 = vmatpush1.msra.mxu0 %v110
    %228 = vmatprep.subr.mxu0 0.0
    %229 = vmatpush1.msra.mxu0 %v107
    %230 = vmatprep.subr.mxu0 0.0
    %231 = vmatpush1.msra.mxu0 %v104
    %232 = vmatprep.subr.mxu0 0.0
    %233 = vmatpush1.msra.mxu0 %v101
    %234 = vmatprep.subr.mxu0 0.0
    %235 = vmatpush1.msra.mxu0 %v98
    %236 = vmatprep.subr.mxu0 0.0
    %237 = vmatpush1.msra.mxu0 %v95
    %238 = vmatprep.subr.mxu0 0.0
    %239 = vmatpush1.msra.mxu0 %v92
    %240 = vmatprep.subr.mxu0 0.0
    %241 = vmatpush1.msra.mxu0 %v89
    %242 = vmatprep.subr.mxu0 0.0
    %243 = vmatpush1.msra.mxu0 %v86
    %244 = vmatprep.subr.mxu0 0.0
    %245 = vmatpush1.msra.mxu0 %v83
    %246 = vmatprep.subr.mxu0 0.0
    %247 = vmatpush1.msra.mxu0 %v80
    %248 = vmatprep.subr.mxu0 0.0
    %249 = vmatpush1.msra.mxu0 %v77
    %250 = vmatprep.subr.mxu0 0.0
    %251 = vmatpush1.msra.mxu0 %v74
    %252 = vmatprep.subr.mxu0 0.0
    %253 = vmatpush2.msra.mxu0 0.0
    %254 = vmatprep.subr.mxu0 0.0
    %255 = vmatpush2.msra.mxu0 0.0
    %256 = vmatprep.subr.mxu0 0.0
    %257 = vmatpush2.msra.mxu0 0.0
    %258 = vmatprep.subr.mxu0 0.0
    %259 = vmatpush2.msra.mxu0 0.0
    %260 = vmatprep.subr.mxu0 0.0
    %261 = vmatpush2.msra.mxu0 0.0
    %262 = vmatprep.subr.mxu0 0.0
    %263 = vmatpush2.msra.mxu0 0.0
    %264 = vmatprep.subr.mxu0 0.0
    %265 = vmatpush2.msra.mxu0 0.0
    %266 = vmatprep.subr.mxu0 0.0
    %267 = vmatpush2.msra.mxu0 0.0
    %268 = vmatprep.subr.mxu0 0.0
    %269 = vmatpush2.msra.mxu0 0.0
    %270 = vmatprep.subr.mxu0 0.0
    %271 = vmatpush2.msra.mxu0 0.0
    %272 = vmatprep.subr.mxu0 0.0
    %273 = vmatpush2.msra.mxu0 0.0
    %274 = vmatprep.subr.mxu0 0.0
    %275 = vmatpush2.msra.mxu0 0.0
    %276 = vmatprep.subr.mxu0 0.0
    %277 = vmatpush2.msra.mxu0 0.0
    %278 = vmatprep.subr.mxu0 0.0
    %279 = vmatpush2.msra.mxu0 0.0
    %280 = vmatprep.subr.mxu0 0.0
    %281 = vmatpush2.msra.mxu0 0.0
    %282 = vmatprep.subr.mxu0 0.0
    %283 = vmatpush2.msra.mxu0 0.0
    %284 = vmatprep.mubr.f32.mxu0 0.0
    %285 = vmatmul.mubr.f32.gmra.mxu0 %v69
    %v286 = vpop.f32.mrf.mxu0
    %v287 = vadd.f32 %v133, %v286
    %v288 = vpop.f32.mrf.mxu0
    %289 = vmatprep.mubr.f32.mxu0 0.0
    %290 = vmatmul.mubr.f32.gmra.mxu0 %v70
    %v291 = vpop.f32.mrf.mxu0
    %v292 = vadd.f32 %v133, %v291
    %v293 = vpop.f32.mrf.mxu0
    %294 = vmatprep.mubr.f32.mxu0 0.0
    %295 = vmatmul.mubr.f32.gmra.mxu0 %v71
    %v296 = vpop.f32.mrf.mxu0
    %v297 = vadd.f32 %v133, %v296
    %v298 = vpop.f32.mrf.mxu0
    %299 = vdwg.mxu0
    %v300 = vsub.f32 0.0, %v204
    %v301 = vsub.f32 0.0, %v206
    %v302 = vsub.f32 0.0, %v287
    %v303 = vsub.f32 0.0, %v210
    %v304 = vsub.f32 0.0, %v212
    %v305 = vsub.f32 0.0, %v292
    %v306 = vsub.f32 0.0, %v216
    %v307 = vsub.f32 0.0, %v218
    %v308 = vsub.f32 0.0, %v297
    %v309 = vmul.f32 %v300, 1.442695
    %v310 = vpow.pop %v309
    %v311 = vmul.f32 %v301, 1.442695
    %v312 = vpow.pop %v311
    %v313 = vmul.f32 %v302, 1.442695
    %v314 = vpow.pop %v313
    %v315 = vmul.f32 %v303, 1.442695
    %v316 = vpow.pop %v315
    %v317 = vmul.f32 %v304, 1.442695
    %v318 = vpow.pop %v317
    %v319 = vmul.f32 %v305, 1.442695
    %v320 = vpow.pop %v319
    %v321 = vmul.f32 %v306, 1.442695
    %v322 = vpow.pop %v321
    %v323 = vmul.f32 %v307, 1.442695
    %v324 = vpow.pop %v323
    %v325 = vmul.f32 %v308, 1.442695
    %v326 = vpow.pop %v325
    %v327 = vadd.f32 %v310, 1.0
    %v328 = vadd.f32 %v312, 1.0
    %v329 = vadd.f32 %v314, 1.0
    %v330 = vadd.f32 %v316, 1.0
    %v331 = vadd.f32 %v318, 1.0
    %v332 = vadd.f32 %v320, 1.0
    %v333 = vadd.f32 %v322, 1.0
    %v334 = vadd.f32 %v324, 1.0
    %v335 = vadd.f32 %v326, 1.0
    %v336 = vrcp.pop %v327
    %v337 = vmul.f32 1.0, %v336
    %v338 = vrcp.pop %v328
    %v339 = vmul.f32 1.0, %v338
    %v340 = vrcp.pop %v329
    %v341 = vmul.f32 1.0, %v340
    %v342 = vrcp.pop %v330
    %v343 = vmul.f32 1.0, %v342
    %v344 = vrcp.pop %v331
    %v345 = vmul.f32 1.0, %v344
    %v346 = vrcp.pop %v332
    %v347 = vmul.f32 1.0, %v346
    %v348 = vrcp.pop %v333
    %v349 = vmul.f32 1.0, %v348
    %v350 = vrcp.pop %v334
    %v351 = vmul.f32 1.0, %v350
    %v352 = vrcp.pop %v335
    %v353 = vmul.f32 1.0, %v352
    %v354 = vmul.f32 %v204, %v337
    %v355 = vmul.f32 %v206, %v339
    %v356 = vmul.f32 %v287, %v341
    %v357 = vmul.f32 %v210, %v343
    %v358 = vmul.f32 %v212, %v345
    %v359 = vmul.f32 %v292, %v347
    %v360 = vmul.f32 %v216, %v349
    %v361 = vmul.f32 %v218, %v351
    %v362 = vmul.f32 %v297, %v353
    %v363 = vld [vmem:[#allocation2] sm:$0xff]
    %v364 = vld [vmem:[#allocation2 + $0x8] sm:$0xff]
    %v365 = vld [vmem:[#allocation2 + $0x10] sm:$0xff]
    %v366 = vld [vmem:[#allocation8] sm:$0xff]
    %v367 = vld [vmem:[#allocation8 + $0x8] sm:$0xff]
    %v368 = vld [vmem:[#allocation8 + $0x10] sm:$0xff]
    %v369 = vld [vmem:[#allocation8 + $0x18] sm:$0xff]
    %v370 = vld [vmem:[#allocation8 + $0x20] sm:$0xff]
    %v371 = vld [vmem:[#allocation8 + $0x28] sm:$0xff]
    %v372 = vld [vmem:[#allocation8 + $0x30] sm:$0xff]
    %v373 = vld [vmem:[#allocation8 + $0x38] sm:$0xff]
    %v374 = vld [vmem:[#allocation8 + $0x40] sm:$0xff]
    %v375 = vld [vmem:[#allocation8 + $0x48] sm:$0xff]
    %v376 = vld [vmem:[#allocation8 + $0x50] sm:$0xff]
    %v377 = vld [vmem:[#allocation8 + $0x58] sm:$0xff]
    %v378 = vld [vmem:[#allocation8 + $0x60] sm:$0xff]
    %v379 = vld [vmem:[#allocation8 + $0x68] sm:$0xff]
    %v380 = vld [vmem:[#allocation8 + $0x70] sm:$0xff]
    %v381 = vld [vmem:[#allocation8 + $0x78] sm:$0xff]
    %v382 = vld [vmem:[#allocation8 + $0x80] sm:$0xff]
    %v383 = vld [vmem:[#allocation8 + $0x88] sm:$0xff]
    %v384 = vld [vmem:[#allocation8 + $0x90] sm:$0xff]
    %v385 = vld [vmem:[#allocation8 + $0x98] sm:$0xff]
    %v386 = vld [vmem:[#allocation8 + $0xa0] sm:$0xff]
    %v387 = vld [vmem:[#allocation8 + $0xa8] sm:$0xff]
    %v388 = vld [vmem:[#allocation8 + $0xb0] sm:$0xff]
    %v389 = vld [vmem:[#allocation8 + $0xb8] sm:$0xff]
    %v390 = vld [vmem:[#allocation8 + $0xc0] sm:$0xff]
    %v391 = vld [vmem:[#allocation8 + $0xc8] sm:$0xff]
    %v392 = vld [vmem:[#allocation8 + $0xd0] sm:$0xff]
    %v393 = vld [vmem:[#allocation8 + $0xd8] sm:$0xff]
    %v394 = vld [vmem:[#allocation8 + $0xe0] sm:$0xff]
    %v395 = vld [vmem:[#allocation8 + $0xe8] sm:$0xff]
    %v396 = vld [vmem:[#allocation8 + $0xf0] sm:$0xff]
    %v397 = vld [vmem:[#allocation8 + $0xf8] sm:$0xff]
    %v398 = vld [vmem:[#allocation8 + $0x100] sm:$0xff]
    %v399 = vld [vmem:[#allocation8 + $0x108] sm:$0xff]
    %v400 = vld [vmem:[#allocation8 + $0x110] sm:$0xff]
    %v401 = vld [vmem:[#allocation8 + $0x118] sm:$0xff]
    %v402 = vld [vmem:[#allocation8 + $0x120] sm:$0xff]
    %v403 = vld [vmem:[#allocation8 + $0x128] sm:$0xff]
    %v404 = vld [vmem:[#allocation8 + $0x130] sm:$0xff]
    %v405 = vld [vmem:[#allocation8 + $0x138] sm:$0xff]
    %v406 = vld [vmem:[#allocation8 + $0x140] sm:$0xff]
    %v407 = vld [vmem:[#allocation8 + $0x148] sm:$0xff]
    %v408 = vld [vmem:[#allocation8 + $0x150] sm:$0xff]
    %v409 = vld [vmem:[#allocation8 + $0x158] sm:$0xff]
    %v410 = vld [vmem:[#allocation8 + $0x160] sm:$0xff]
    %v411 = vld [vmem:[#allocation8 + $0x168] sm:$0xff]
    %v412 = vld [vmem:[#allocation8 + $0x170] sm:$0xff]
    %v413 = vld [vmem:[#allocation8 + $0x178] sm:$0xff]
    %414 = vmatprep.subr.mxu0 0.0
    %415 = vmatpush1.msra.mxu0 %v381
    %416 = vmatprep.subr.mxu0 0.0
    %417 = vmatpush1.msra.mxu0 %v380
    %418 = vmatprep.subr.mxu0 0.0
    %419 = vmatpush1.msra.mxu0 %v379
    %420 = vmatprep.subr.mxu0 0.0
    %421 = vmatpush1.msra.mxu0 %v378
    %422 = vmatprep.subr.mxu0 0.0
    %423 = vmatpush1.msra.mxu0 %v377
    %424 = vmatprep.subr.mxu0 0.0
    %425 = vmatpush1.msra.mxu0 %v376
    %426 = vmatprep.subr.mxu0 0.0
    %427 = vmatpush1.msra.mxu0 %v375
    %428 = vmatprep.subr.mxu0 0.0
    %429 = vmatpush1.msra.mxu0 %v374
    %430 = vmatprep.subr.mxu0 0.0
    %431 = vmatpush1.msra.mxu0 %v373
    %432 = vmatprep.subr.mxu0 0.0
    %433 = vmatpush1.msra.mxu0 %v372
    %434 = vmatprep.subr.mxu0 0.0
    %435 = vmatpush1.msra.mxu0 %v371
    %436 = vmatprep.subr.mxu0 0.0
    %437 = vmatpush1.msra.mxu0 %v370
    %438 = vmatprep.subr.mxu0 0.0
    %439 = vmatpush1.msra.mxu0 %v369
    %440 = vmatprep.subr.mxu0 0.0
    %441 = vmatpush1.msra.mxu0 %v368
    %442 = vmatprep.subr.mxu0 0.0
    %443 = vmatpush1.msra.mxu0 %v367
    %444 = vmatprep.subr.mxu0 0.0
    %445 = vmatpush1.msra.mxu0 %v366
    %446 = vmatprep.subr.mxu0 0.0
    %447 = vmatpush2.msra.mxu0 %v397
    %448 = vmatprep.subr.mxu0 0.0
    %449 = vmatpush2.msra.mxu0 %v396
    %450 = vmatprep.subr.mxu0 0.0
    %451 = vmatpush2.msra.mxu0 %v395
    %452 = vmatprep.subr.mxu0 0.0
    %453 = vmatpush2.msra.mxu0 %v394
    %454 = vmatprep.subr.mxu0 0.0
    %455 = vmatpush2.msra.mxu0 %v393
    %456 = vmatprep.subr.mxu0 0.0
    %457 = vmatpush2.msra.mxu0 %v392
    %458 = vmatprep.subr.mxu0 0.0
    %459 = vmatpush2.msra.mxu0 %v391
    %460 = vmatprep.subr.mxu0 0.0
    %461 = vmatpush2.msra.mxu0 %v390
    %462 = vmatprep.subr.mxu0 0.0
    %463 = vmatpush2.msra.mxu0 %v389
    %464 = vmatprep.subr.mxu0 0.0
    %465 = vmatpush2.msra.mxu0 %v388
    %466 = vmatprep.subr.mxu0 0.0
    %467 = vmatpush2.msra.mxu0 %v387
    %468 = vmatprep.subr.mxu0 0.0
    %469 = vmatpush2.msra.mxu0 %v386
    %470 = vmatprep.subr.mxu0 0.0
    %471 = vmatpush2.msra.mxu0 %v385
    %472 = vmatprep.subr.mxu0 0.0
    %473 = vmatpush2.msra.mxu0 %v384
    %474 = vmatprep.subr.mxu0 0.0
    %475 = vmatpush2.msra.mxu0 %v383
    %476 = vmatprep.subr.mxu0 0.0
    %477 = vmatpush2.msra.mxu0 %v382
    %478 = vmatprep.mubr.f32.mxu0 %v355
    %479 = vmatmul.mubr.f32.gmra.mxu0 %v354
    %v480 = vpop.f32.mrf.mxu0
    %v481 = vadd.f32 0.0, %v480
    %v482 = vpop.f32.mrf.mxu0
    %483 = vmatprep.mubr.f32.mxu0 %v358
    %484 = vmatmul.mubr.f32.gmra.mxu0 %v357
    %v485 = vpop.f32.mrf.mxu0
    %v486 = vadd.f32 0.0, %v485
    %v487 = vpop.f32.mrf.mxu0
    %488 = vmatprep.mubr.f32.mxu0 %v361
    %489 = vmatmul.mubr.f32.gmra.mxu0 %v360
    %v490 = vpop.f32.mrf.mxu0
    %v491 = vadd.f32 0.0, %v490
    %v492 = vpop.f32.mrf.mxu0
    %493 = vdwg.mxu0
    %494 = vmatprep.subr.mxu0 0.0
    %495 = vmatpush1.msra.mxu0 %v413
    %496 = vmatprep.subr.mxu0 0.0
    %497 = vmatpush1.msra.mxu0 %v412
    %498 = vmatprep.subr.mxu0 0.0
    %499 = vmatpush1.msra.mxu0 %v411
    %500 = vmatprep.subr.mxu0 0.0
    %501 = vmatpush1.msra.mxu0 %v410
    %502 = vmatprep.subr.mxu0 0.0
    %503 = vmatpush1.msra.mxu0 %v409
    %504 = vmatprep.subr.mxu0 0.0
    %505 = vmatpush1.msra.mxu0 %v408
    %506 = vmatprep.subr.mxu0 0.0
    %507 = vmatpush1.msra.mxu0 %v407
    %508 = vmatprep.subr.mxu0 0.0
    %509 = vmatpush1.msra.mxu0 %v406
    %510 = vmatprep.subr.mxu0 0.0
    %511 = vmatpush1.msra.mxu0 %v405
    %512 = vmatprep.subr.mxu0 0.0
    %513 = vmatpush1.msra.mxu0 %v404
    %514 = vmatprep.subr.mxu0 0.0
    %515 = vmatpush1.msra.mxu0 %v403
    %516 = vmatprep.subr.mxu0 0.0
    %517 = vmatpush1.msra.mxu0 %v402
    %518 = vmatprep.subr.mxu0 0.0
    %519 = vmatpush1.msra.mxu0 %v401
    %520 = vmatprep.subr.mxu0 0.0
    %521 = vmatpush1.msra.mxu0 %v400
    %522 = vmatprep.subr.mxu0 0.0
    %523 = vmatpush1.msra.mxu0 %v399
    %524 = vmatprep.subr.mxu0 0.0
    %525 = vmatpush1.msra.mxu0 %v398
    %526 = vmatprep.subr.mxu0 0.0
    %527 = vmatpush2.msra.mxu0 0.0
    %528 = vmatprep.subr.mxu0 0.0
    %529 = vmatpush2.msra.mxu0 0.0
    %530 = vmatprep.subr.mxu0 0.0
    %531 = vmatpush2.msra.mxu0 0.0
    %532 = vmatprep.subr.mxu0 0.0
    %533 = vmatpush2.msra.mxu0 0.0
    %534 = vmatprep.subr.mxu0 0.0
    %535 = vmatpush2.msra.mxu0 0.0
    %536 = vmatprep.subr.mxu0 0.0
    %537 = vmatpush2.msra.mxu0 0.0
    %538 = vmatprep.subr.mxu0 0.0
    %539 = vmatpush2.msra.mxu0 0.0
    %540 = vmatprep.subr.mxu0 0.0
    %541 = vmatpush2.msra.mxu0 0.0
    %542 = vmatprep.subr.mxu0 0.0
    %543 = vmatpush2.msra.mxu0 0.0
    %544 = vmatprep.subr.mxu0 0.0
    %545 = vmatpush2.msra.mxu0 0.0
    %546 = vmatprep.subr.mxu0 0.0
    %547 = vmatpush2.msra.mxu0 0.0
    %548 = vmatprep.subr.mxu0 0.0
    %549 = vmatpush2.msra.mxu0 0.0
    %550 = vmatprep.subr.mxu0 0.0
    %551 = vmatpush2.msra.mxu0 0.0
    %552 = vmatprep.subr.mxu0 0.0
    %553 = vmatpush2.msra.mxu0 0.0
    %554 = vmatprep.subr.mxu0 0.0
    %555 = vmatpush2.msra.mxu0 0.0
    %556 = vmatprep.subr.mxu0 0.0
    %557 = vmatpush2.msra.mxu0 0.0
    %558 = vmatprep.mubr.f32.mxu0 0.0
    %559 = vmatmul.mubr.f32.gmra.mxu0 %v356
    %v560 = vpop.f32.mrf.mxu0
    %v561 = vadd.f32 %v481, %v560
    %v562 = vpop.f32.mrf.mxu0
    %563 = vmatprep.mubr.f32.mxu0 0.0
    %564 = vmatmul.mubr.f32.gmra.mxu0 %v359
    %v565 = vpop.f32.mrf.mxu0
    %v566 = vadd.f32 %v486, %v565
    %v567 = vpop.f32.mrf.mxu0
    %568 = vmatprep.mubr.f32.mxu0 0.0
    %569 = vmatmul.mubr.f32.gmra.mxu0 %v362
    %v570 = vpop.f32.mrf.mxu0
    %v571 = vadd.f32 %v491, %v570
    %v572 = vpop.f32.mrf.mxu0
    %573 = vdwg.mxu0
    %v574 = vadd.f32 %v363, %v561
    %v575 = vadd.f32 %v364, %v566
    %v576 = vadd.f32 %v365, %v571
    %577 = vst [vmem:[#allocation2] sm:$0xff] %v574
    %578 = vst [vmem:[#allocation2 + $0x8] sm:$0xff] %v575
    %579 = vst [vmem:[#allocation2 + $0x10] sm:$0xff] %v576
    // Predicated region
    $region38: #{tpu_custom_call.1} parent=1 // pred_check
      %p580 = pneg %p62
    $region39: #{tpu_custom_call.1} parent=1 // pred_check_branch
      %582 = sbr.rel (%p580) target = $region41
    $region40: #{tpu_custom_call.1} parent=1 // pred_region
      %v583 = vld [vmem:[#allocation2] sm:$0xff]
      %v584 = vld [vmem:[#allocation2 + $0x8] sm:$0xff]
      %v585 = vld [vmem:[#allocation2 + $0x10] sm:$0xff]
      %v586 = vld [vmem:[%s4] sm:$0x1]
      %v588 = vlaneseq
      %v589 = vshrl.u32 %v588, 7
      %v590 = vsub.s32 0, %v589
      %v591 = vrot.slane %v586, %v590
      %v593 = vadd.f32 %v583, %v591
      %v594 = vadd.f32 %v584, %v591
      %v595 = vadd.f32 %v585, %v591
      %596 = vst [vmem:[#allocation9] sm:$0xff] %v593
      %597 = vst [vmem:[#allocation9 + $0x8] sm:$0xff] %v594
      %598 = vst [vmem:[#allocation9 + $0x10] sm:$0xff] %v595
    $region41: #{tpu_custom_call.1} parent=1 // pred_fallthru
      _
    // Predicated region
    $region42: #{tpu_custom_call.1} parent=1 // pred_check
      _
    $region43: #{tpu_custom_call.1} parent=1 // pred_check_branch
      %600 = sbr.rel (0) target = $region45
    $region44: #{tpu_custom_call.1} parent=1 // pred_region
      %s602 = ssub.s32 384, 384
      %603 = vsyncadd [#allocation5], %s602
      %s604 = sshll.u32 [#allocation9], 4
      %s605 = int_to_ptr.vmem [resolvable:$true] %s604
      %610 = dma.vmem_to_hbm [thread:$0]  %s605, 384, %s5, [#allocation5], 128, 128, 8
    $region45: #{tpu_custom_call.1} parent=1 // pred_fallthru
      _
    // Predicated region
    $region46: #{tpu_custom_call.1} parent=1 // pred_check
      _
    $region47: #{tpu_custom_call.1} parent=1 // pred_check_branch
      %612 = sbr.rel (0) target = $region49
    $region48: #{tpu_custom_call.1} parent=1 // pred_region
      %613 = dma.done [#allocation5], 384
    $region49: #{tpu_custom_call.1} parent=1 // pred_fallthru
      _
    %614 = vsyncpa [#allocation4], 1
    %615 = vsyncpa [#allocation7], 1
    %616 = vsyncpa [#allocation5], 1

</llo_original>
